<compile_context>
chip_gen: v7x
topology: tpu7x:2x2x1
jax: 0.10.0
libtpu: 0.0.40
codegen_flags: <defaults>
</compile_context>

<pallas_src>
import functools

import jax
import jax.numpy as jnp
from jax.experimental import pallas as pl
from jax.experimental.pallas import tpu as pltpu


def _make_divisible(ch, divisor=8, min_ch=None):
    if min_ch is None:
        min_ch = divisor
    new_ch = max(min_ch, int(ch + divisor / 2) // divisor * divisor)
    if new_ch < 0.9 * ch:
        new_ch += divisor
    return new_ch


def _se_kernel(x_ref, w1t_ref, b1_ref, w2t_ref, b2_ref, o_ref, *, inv_hw):
    # x block: (BN, C, HW) in the input dtype.
    x = x_ref[...]

    # adaptive_avg_pool2d(x, (1,1)) == mean over spatial dims.  Accumulate in
    # f32 without materializing a full f32 copy of the block; multiply by the
    # constant 1/HW instead of dividing.
    pooled = jnp.sum(x, axis=-1, dtype=jnp.float32) * inv_hw              # (BN, C)

    # fc1: 1x1 conv == matmul C -> Cs (weight pre-transposed), then ReLU.
    hidden = jnp.dot(pooled, w1t_ref[...],
                     preferred_element_type=jnp.float32) + b1_ref[...]    # (BN, Cs)
    hidden = jnp.maximum(hidden, 0.0)

    # fc2: Cs -> C, then hardsigmoid(x) = clip(x/6 + 1/2, 0, 1).
    s = jnp.dot(hidden, w2t_ref[...],
                preferred_element_type=jnp.float32) + b2_ref[...]         # (BN, C)
    scale = jnp.clip(s * (1.0 / 6.0) + 0.5, 0.0, 1.0)                     # (BN, C) f32

    # Per-channel rescale, broadcast over the spatial (lane) dim, done in the
    # input dtype (only the tiny (BN, C) scale is cast).
    o_ref[...] = x * scale.astype(x.dtype)[:, :, None]


def squeeze_excitation(x, w1, b1, w2, b2, *, donate_x=False):
    """SE block forward.

    x: (N, C, H, W); w1: (Cs, C); b1: (Cs,); w2: (C, Cs); b2: (C,).
    donate_x: alias x's buffer to the output (only saves HBM traffic when the
    caller donates x at the jit boundary, e.g. jax.jit(..., donate_argnums=0)).
    """
    N, C, H, W = x.shape
    Cs = w1.shape[0]
    HW = H * W

    # Contiguous reshape: bitcast at the XLA level, no extra HBM pass.
    x_flat = x.reshape(N, C, HW)

    # Block sizing: ~1-2 MiB blocks already hit ~85% of the HBM roofline;
    # keep enough grid steps for megacore sharding and pipeline overlap.
    itemsize = jnp.dtype(x.dtype).itemsize
    row_bytes = C * HW * itemsize
    target_block_bytes = 2 * 1024 * 1024
    BN = max(1, min(N, target_block_bytes // max(1, row_bytes)))
    if N >= 4:
        BN = min(BN, pl.cdiv(N, 4))   # >= 4 steps: 2 per TC on v7x, overlap preserved
    elif N >= 2:
        BN = min(BN, pl.cdiv(N, 2))   # at least one step per TensorCore
    grid = (pl.cdiv(N, BN),)

    w1t = w1.T.astype(jnp.float32)                 # (C, Cs)
    w2t = w2.T.astype(jnp.float32)                 # (Cs, C)
    b1_2d = b1.reshape(1, Cs).astype(jnp.float32)  # (1, Cs)
    b2_2d = b2.reshape(1, C).astype(jnp.float32)   # (1, C)

    def const_spec(shape):
        # Constant operands: fetched once, single-buffered to save VMEM.
        return pl.BlockSpec(shape, lambda n: (0,) * len(shape),
                            pipeline_mode=pl.Buffered(1))

    out = pl.pallas_call(
        functools.partial(_se_kernel, inv_hw=1.0 / HW),
        out_shape=jax.ShapeDtypeStruct((N, C, HW), x.dtype),
        grid_spec=pltpu.PrefetchScalarGridSpec(
            num_scalar_prefetch=0,
            grid=grid,
            in_specs=[
                # Last two dims equal the full array dims, so HW need not be a
                # multiple of 128 (masked tail stores, no wrapper pad/crop).
                pl.BlockSpec((BN, C, HW), lambda n: (n, 0, 0)),  # x slab
                const_spec((C, Cs)),                             # w1^T
                const_spec((1, Cs)),                             # b1
                const_spec((Cs, C)),                             # w2^T
                const_spec((1, C)),                              # b2
            ],
            out_specs=pl.BlockSpec((BN, C, HW), lambda n: (n, 0, 0)),
        ),
        compiler_params=pltpu.CompilerParams(
            dimension_semantics=("parallel",),
            vmem_limit_bytes=32 * 1024 * 1024),
        input_output_aliases=({0: 0} if donate_x else {}),
    )(x_flat, w1t, b1_2d, w2t, b2_2d)

    return out.reshape(N, C, H, W)


def _reference(x, w1, b1, w2, b2):
    # Pure-JAX reference mirroring the PyTorch forward.
    pooled = jnp.mean(x, axis=(2, 3))                        # (N, C)
    h = jnp.maximum(pooled @ w1.T + b1, 0.0)                 # (N, Cs)
    s = h @ w2.T + b2                                        # (N, C)
    scale = jnp.clip(s / 6.0 + 0.5, 0.0, 1.0)                # hardsigmoid
    return x * scale[:, :, None, None]


def _run_case(key, N, C, H, W):
    Cs = _make_divisible(C // 4, 8)                          # squeeze_channel
    kx, k1, k2, k3, k4 = jax.random.split(key, 5)
    x = jax.random.normal(kx, (N, C, H, W), dtype=jnp.float32)
    w1 = jax.random.normal(k1, (Cs, C), dtype=jnp.float32) * 0.1
    b1 = jax.random.normal(k2, (Cs,), dtype=jnp.float32) * 0.1
    w2 = jax.random.normal(k3, (C, Cs), dtype=jnp.float32) * 0.1
    b2 = jax.random.normal(k4, (C,), dtype=jnp.float32) * 0.1

    out = squeeze_excitation(x, w1, b1, w2, b2)
    jax.block_until_ready(out)
    ref = _reference(x, w1, b1, w2, b2)
    assert jnp.allclose(out, ref, atol=1e-5, rtol=1e-5), \
        f"mismatch vs reference for shape {(N, C, H, W)}"


if __name__ == "__main__":
    key = jax.random.PRNGKey(0)
    k_a, k_b = jax.random.split(key)

    # Primary small case consistent with the module.
    _run_case(k_a, N=2, C=4, H=16, W=16)

    # Exercise the no-pad path (HW = 49, not a multiple of 128 -> masked tail
    # stores) and a ragged final batch block (N=3, BN=2).
    _run_case(k_b, N=3, C=8, H=7, W=7)

    print("KERNEL_OK")
</pallas_src>

<mosaic_0001>
module attributes {stable_mosaic.version = 11 : i64} {
  func.func @_se_kernel(%arg0: i32, %arg1: memref<1x4x256xf32, #tpu.memory_space<vmem>>, %arg2: memref<4x8xf32, #tpu.memory_space<vmem>>, %arg3: memref<1x8xf32, #tpu.memory_space<vmem>>, %arg4: memref<8x4xf32, #tpu.memory_space<vmem>>, %arg5: memref<1x4xf32, #tpu.memory_space<vmem>>, %arg6: memref<1x4x256xf32, #tpu.memory_space<vmem>>) attributes {dimension_semantics = [#tpu.dimension_semantics<parallel>], iteration_bounds = array<i64: 2>, scalar_prefetch = 0 : i64, scratch_operands = 0 : i64, tpu.core_type = #tpu.core_type<tc>, window_params = [{transform_indices = @transform_0, window_bounds = array<i64: 1, 4, 256>}, {pipeline_mode = #tpu.pipeline_mode<synchronous>, transform_indices = @transform_1, window_bounds = array<i64: 4, 8>}, {pipeline_mode = #tpu.pipeline_mode<synchronous>, transform_indices = @transform_2, window_bounds = array<i64: 1, 8>}, {pipeline_mode = #tpu.pipeline_mode<synchronous>, transform_indices = @transform_3, window_bounds = array<i64: 8, 4>}, {pipeline_mode = #tpu.pipeline_mode<synchronous>, transform_indices = @transform_4, window_bounds = array<i64: 1, 4>}, {transform_indices = @transform_5, window_bounds = array<i64: 1, 4, 256>}]} {
    %c0 = arith.constant 0 : index
    %c0_0 = arith.constant 0 : index
    %c0_1 = arith.constant 0 : index
    %0 = vector.load %arg1[%c0, %c0_0, %c0_1] : memref<1x4x256xf32, #tpu.memory_space<vmem>>, vector<1x4x256xf32>
    %cst = arith.constant dense<0.000000e+00> : vector<1x4xf32>
    %1 = vector.multi_reduction <add>, %0, %cst [2] : vector<1x4x256xf32> to vector<1x4xf32>
    %cst_2 = arith.constant 3.906250e-03 : f32
    %2 = vector.broadcast %cst_2 : f32 to vector<1x4xf32>
    %3 = arith.mulf %1, %2 : vector<1x4xf32>
    %c0_3 = arith.constant 0 : index
    %c0_4 = arith.constant 0 : index
    %4 = vector.load %arg2[%c0_3, %c0_4] : memref<4x8xf32, #tpu.memory_space<vmem>>, vector<4x8xf32>
    %cst_5 = arith.constant dense<0.000000e+00> : vector<1x8xf32>
    %5 = tpu.matmul %3, %4, %cst_5 {dimension_numbers = #tpu.dot_dimension_numbers<[1], [0], [0], [1], [0, 0, 1, 1], [], []>} : vector<1x4xf32>, vector<4x8xf32>, vector<1x8xf32> -> vector<1x8xf32>
    %c0_6 = arith.constant 0 : index
    %c0_7 = arith.constant 0 : index
    %6 = vector.load %arg3[%c0_6, %c0_7] : memref<1x8xf32, #tpu.memory_space<vmem>>, vector<1x8xf32>
    %7 = arith.addf %5, %6 : vector<1x8xf32>
    %cst_8 = arith.constant 0.000000e+00 : f32
    %8 = vector.broadcast %cst_8 : f32 to vector<1x8xf32>
    %9 = arith.maximumf %7, %8 : vector<1x8xf32>
    %c0_9 = arith.constant 0 : index
    %c0_10 = arith.constant 0 : index
    %10 = vector.load %arg4[%c0_9, %c0_10] : memref<8x4xf32, #tpu.memory_space<vmem>>, vector<8x4xf32>
    %cst_11 = arith.constant dense<0.000000e+00> : vector<1x4xf32>
    %11 = tpu.matmul %9, %10, %cst_11 {dimension_numbers = #tpu.dot_dimension_numbers<[1], [0], [0], [1], [0, 0, 1, 1], [], []>} : vector<1x8xf32>, vector<8x4xf32>, vector<1x4xf32> -> vector<1x4xf32>
    %c0_12 = arith.constant 0 : index
    %c0_13 = arith.constant 0 : index
    %12 = vector.load %arg5[%c0_12, %c0_13] : memref<1x4xf32, #tpu.memory_space<vmem>>, vector<1x4xf32>
    %13 = arith.addf %11, %12 : vector<1x4xf32>
    %cst_14 = arith.constant 0.166666672 : f32
    %14 = vector.broadcast %cst_14 : f32 to vector<1x4xf32>
    %15 = arith.mulf %13, %14 : vector<1x4xf32>
    %cst_15 = arith.constant 5.000000e-01 : f32
    %16 = vector.broadcast %cst_15 : f32 to vector<1x4xf32>
    %17 = arith.addf %15, %16 : vector<1x4xf32>
    %cst_16 = arith.constant 0.000000e+00 : f32
    %cst_17 = arith.constant 1.000000e+00 : f32
    %18 = vector.broadcast %cst_16 : f32 to vector<1x4xf32>
    %19 = arith.maximumf %18, %17 : vector<1x4xf32>
    %20 = vector.broadcast %cst_17 : f32 to vector<1x4xf32>
    %21 = arith.minimumf %20, %19 : vector<1x4xf32>
    %22 = vector.shape_cast %21 : vector<1x4xf32> to vector<1x4x1xf32>
    %23 = vector.broadcast %22 : vector<1x4x1xf32> to vector<1x4x256xf32>
    %24 = arith.mulf %0, %23 : vector<1x4x256xf32>
    %c0_18 = arith.constant 0 : index
    %c0_19 = arith.constant 0 : index
    %c0_20 = arith.constant 0 : index
    %25 = vector.load %arg6[%c0_18, %c0_19, %c0_20] : memref<1x4x256xf32, #tpu.memory_space<vmem>>, vector<1x4x256xf32>
    tpu.vector_store %arg6[%c0_18, %c0_19, %c0_20], %24 {strides = array<i32>} : memref<1x4x256xf32, #tpu.memory_space<vmem>>, vector<1x4x256xf32>,
    return
  }
  func.func @transform_0(%arg0: i32) -> (i32, i32, i32) {
    %c0_i32 = arith.constant 0 : i32
    %c0_i32_0 = arith.constant 0 : i32
    %c0_i32_1 = arith.constant 0 : i32
    return %arg0, %c0_i32, %c0_i32_0 : i32, i32, i32
  }
  func.func @transform_1(%arg0: i32) -> (i32, i32) {
    %c0_i32 = arith.constant 0 : i32
    %c0_i32_0 = arith.constant 0 : i32
    %c0_i32_1 = arith.constant 0 : i32
    return %c0_i32, %c0_i32_0 : i32, i32
  }
  func.func @transform_2(%arg0: i32) -> (i32, i32) {
    %c0_i32 = arith.constant 0 : i32
    %c0_i32_0 = arith.constant 0 : i32
    %c0_i32_1 = arith.constant 0 : i32
    return %c0_i32, %c0_i32_0 : i32, i32
  }
  func.func @transform_3(%arg0: i32) -> (i32, i32) {
    %c0_i32 = arith.constant 0 : i32
    %c0_i32_0 = arith.constant 0 : i32
    %c0_i32_1 = arith.constant 0 : i32
    return %c0_i32, %c0_i32_0 : i32, i32
  }
  func.func @transform_4(%arg0: i32) -> (i32, i32) {
    %c0_i32 = arith.constant 0 : i32
    %c0_i32_0 = arith.constant 0 : i32
    %c0_i32_1 = arith.constant 0 : i32
    return %c0_i32, %c0_i32_0 : i32, i32
  }
  func.func @transform_5(%arg0: i32) -> (i32, i32, i32) {
    %c0_i32 = arith.constant 0 : i32
    %c0_i32_0 = arith.constant 0 : i32
    %c0_i32_1 = arith.constant 0 : i32
    return %arg0, %c0_i32, %c0_i32_0 : i32, i32, i32
  }
}

</mosaic_0001>

<llo_original>
// kernel: tpu_custom_call.1
$region0: #{tpu_custom_call.1}
  #allocation0 [shape = 'u32[]', space=smem, size = 0x4, offset = 0x4, fixed_abs, tag = 'smem constant byte address 0x4 - core index']
  #allocation1 [shape = 'u32[144,128]{1,0:T(1,128)}', space=vmem, size = 0x12000, scoped, tag = 'internal scratch']
  %s0 = inlined_call_operand.hbm [shape: f32[2,4,256], index: 0, kind: input, shape index: {}]
  %s1 = inlined_call_operand.vmem [shape: f32[4,8], index: 1, kind: input, shape index: {}]
  %s2 = inlined_call_operand.vmem [shape: f32[1,8], index: 2, kind: input, shape index: {}]
  %s3 = inlined_call_operand.vmem [shape: f32[8,4], index: 3, kind: input, shape index: {}]
  %s4 = inlined_call_operand.vmem [shape: f32[1,4], index: 4, kind: input, shape index: {}]
  %s5 = inlined_call_operand.hbm [shape: f32[2,4,256], index: 5, kind: output, shape index: {}]
  %s6 = sld [smem:[#allocation0]]
  $region57: #{tpu_custom_call.1} parent=0
    _
  %s8 = ssub.s32 1, %s6
  %s9 = scalar_select 0, %s8, %s6
  $region1: #{tpu_custom_call.1} parent=0
    #allocation2 [shape = 'u8[8192]{0}', space=vmem, size = 0x2000, scoped, tag = 'input window, operand 0']
    #allocation3 [shape = 's32[2]{0}', space=sflag, size = 0x8, scoped, tag = 'scoped memory for tpu_custom_call.1']
    #allocation4 [shape = 's32[2]{0}', space=sflag, size = 0x8, scoped, tag = 'scoped memory for tpu_custom_call.1']
    #allocation5 [shape = 'u8[8192]{0}', space=vmem, size = 0x2000, scoped, tag = 'output window, operand 0']
    %10 = vsyncpa [#allocation3], 0
    %s11 = scalar_lea.sflag [#allocation3], 1
    %12 = vsyncpa %s11, 0
    %13 = vsyncpa [#allocation4], 0
    %s14 = scalar_lea.sflag [#allocation4], 1
    %15 = vsyncpa %s14, 0
    loop: start=0, step=1, limit=4
    $region2: #{tpu_custom_call.1} parent=1 // loop_pre_header
      _
    $region3: #{tpu_custom_call.1} parent=1 // loop_header
      %s17 = sphi 0, %s21
      %p18 = scmp.ge.s32.totalorder %s17, 4
      %s27 = sphi 0, %s29
      %s30 = sphi 0, %s27
      %s31 = sphi 0, %s30
      %s47 = sphi 0, %s31
      %s51 = sphi 0, %s51
      %s53 = sphi 0, %s51
      %s54 = sphi 0, %s53
      %s68 = sphi 0, %s54
      %s72 = sphi 0, %s72
      %s74 = sphi 0, %s72
      %s75 = sphi 0, %s74
      %s89 = sphi 0, %s75
      %s93 = sphi 0, %s93
      %s95 = sphi 0, %s93
      %s96 = sphi 0, %s95
      %s110 = sphi 0, %s96
      %s114 = sphi 0, %s114
      %s116 = sphi 0, %s114
      %s117 = sphi 0, %s116
      %s131 = sphi 0, %s117
      %s137 = sphi 0, %s139
      %s140 = sphi 0, %s137
      %s141 = sphi 0, %s140
      %s157 = sphi 0, %s141
    $region4: #{tpu_custom_call.1} parent=1 // loop_header_branch
      %20 = sbr.rel (%p18) target = $region8
    $region5: #{tpu_custom_call.1} parent=1 // loop_body
      %s22 = ssub.s32 %s17, 1
      %s23 = ssub.s32 %s17, 2
      %s24 = sadd.s32 %s17, 1
      %s25 = ssub.s32 %s17, %s24
      %p26 = scmp.eq.s32.totalorder %s25, 0
      %s28 = sadd.s32 %s27, 1
      %s29 = scalar_select %p26, %s27, %s28
      %p32 = pneg %p26
      %p33 = scmp.eq.s32.totalorder %s17, 1
      %p34 = por %p32, %p33
      %p35 = scmp.ne.s32.totalorder %s27, %s30
      %p36 = scmp.eq.s32.totalorder %s17, 0
      %p37 = por %p35, %p36
      %p38 = scmp.ne.s32.totalorder %s27, %s30
      %p39 = scmp.eq.s32.totalorder %s22, 1
      %p40 = por %p38, %p39
      %p41 = scmp.ne.s32.totalorder %s30, %s31
      %p42 = scmp.eq.s32.totalorder %s22, 0
      %p43 = por %p41, %p42
      %p44 = scmp.ne.s32.totalorder %s30, %s31
      %p45 = scmp.eq.s32.totalorder %s23, 1
      %p46 = por %p44, %p45
      %p48 = scmp.ne.s32.totalorder %s31, %s47
      %p49 = scmp.eq.s32.totalorder %s23, 0
      %p50 = por %p48, %p49
      %s52 = sadd.s32 %s51, 1
      %p55 = scmp.eq.s32.totalorder %s17, 1
      %p56 = scmp.ne.s32.totalorder %s51, %s53
      %p57 = scmp.eq.s32.totalorder %s17, 0
      %p58 = por %p56, %p57
      %p59 = scmp.ne.s32.totalorder %s51, %s53
      %p60 = scmp.eq.s32.totalorder %s22, 1
      %p61 = por %p59, %p60
      %p62 = scmp.ne.s32.totalorder %s53, %s54
      %p63 = scmp.eq.s32.totalorder %s22, 0
      %p64 = por %p62, %p63
      %p65 = scmp.ne.s32.totalorder %s53, %s54
      %p66 = scmp.eq.s32.totalorder %s23, 1
      %p67 = por %p65, %p66
      %p69 = scmp.ne.s32.totalorder %s54, %s68
      %p70 = scmp.eq.s32.totalorder %s23, 0
      %p71 = por %p69, %p70
      %s73 = sadd.s32 %s72, 1
      %p76 = scmp.eq.s32.totalorder %s17, 1
      %p77 = scmp.ne.s32.totalorder %s72, %s74
      %p78 = scmp.eq.s32.totalorder %s17, 0
      %p79 = por %p77, %p78
      %p80 = scmp.ne.s32.totalorder %s72, %s74
      %p81 = scmp.eq.s32.totalorder %s22, 1
      %p82 = por %p80, %p81
      %p83 = scmp.ne.s32.totalorder %s74, %s75
      %p84 = scmp.eq.s32.totalorder %s22, 0
      %p85 = por %p83, %p84
      %p86 = scmp.ne.s32.totalorder %s74, %s75
      %p87 = scmp.eq.s32.totalorder %s23, 1
      %p88 = por %p86, %p87
      %p90 = scmp.ne.s32.totalorder %s75, %s89
      %p91 = scmp.eq.s32.totalorder %s23, 0
      %p92 = por %p90, %p91
      %s94 = sadd.s32 %s93, 1
      %p97 = scmp.eq.s32.totalorder %s17, 1
      %p98 = scmp.ne.s32.totalorder %s93, %s95
      %p99 = scmp.eq.s32.totalorder %s17, 0
      %p100 = por %p98, %p99
      %p101 = scmp.ne.s32.totalorder %s93, %s95
      %p102 = scmp.eq.s32.totalorder %s22, 1
      %p103 = por %p101, %p102
      %p104 = scmp.ne.s32.totalorder %s95, %s96
      %p105 = scmp.eq.s32.totalorder %s22, 0
      %p106 = por %p104, %p105
      %p107 = scmp.ne.s32.totalorder %s95, %s96
      %p108 = scmp.eq.s32.totalorder %s23, 1
      %p109 = por %p107, %p108
      %p111 = scmp.ne.s32.totalorder %s96, %s110
      %p112 = scmp.eq.s32.totalorder %s23, 0
      %p113 = por %p111, %p112
      %s115 = sadd.s32 %s114, 1
      %p118 = scmp.eq.s32.totalorder %s17, 1
      %p119 = scmp.ne.s32.totalorder %s114, %s116
      %p120 = scmp.eq.s32.totalorder %s17, 0
      %p121 = por %p119, %p120
      %p122 = scmp.ne.s32.totalorder %s114, %s116
      %p123 = scmp.eq.s32.totalorder %s22, 1
      %p124 = por %p122, %p123
      %p125 = scmp.ne.s32.totalorder %s116, %s117
      %p126 = scmp.eq.s32.totalorder %s22, 0
      %p127 = por %p125, %p126
      %p128 = scmp.ne.s32.totalorder %s116, %s117
      %p129 = scmp.eq.s32.totalorder %s23, 1
      %p130 = por %p128, %p129
      %p132 = scmp.ne.s32.totalorder %s117, %s131
      %p133 = scmp.eq.s32.totalorder %s23, 0
      %p134 = por %p132, %p133
      %s135 = ssub.s32 %s17, %s24
      %p136 = scmp.eq.s32.totalorder %s135, 0
      %s138 = sadd.s32 %s137, 1
      %s139 = scalar_select %p136, %s137, %s138
      %p142 = pneg %p136
      %p143 = scmp.eq.s32.totalorder %s17, 1
      %p144 = por %p142, %p143
      %p145 = scmp.ne.s32.totalorder %s137, %s140
      %p146 = scmp.eq.s32.totalorder %s17, 0
      %p147 = por %p145, %p146
      %p148 = scmp.ne.s32.totalorder %s137, %s140
      %p149 = scmp.eq.s32.totalorder %s22, 1
      %p150 = por %p148, %p149
      %p151 = scmp.ne.s32.totalorder %s140, %s141
      %p152 = scmp.eq.s32.totalorder %s22, 0
      %p153 = por %p151, %p152
      %p154 = scmp.ne.s32.totalorder %s140, %s141
      %p155 = scmp.eq.s32.totalorder %s23, 1
      %p156 = por %p154, %p155
      %p158 = scmp.ne.s32.totalorder %s141, %s157
      %p159 = scmp.eq.s32.totalorder %s23, 0
      %p160 = por %p158, %p159
      %p161 = scmp.le.s32.totalorder 1, %s17
      %p162 = scmp.lt.s32.totalorder %s17, 3
      %p163 = pnand %p161, %p162
      %p164 = pneg %p163
      // Predicated region
      $region9: #{tpu_custom_call.1} parent=5 // pred_check
        _
      $region10: #{tpu_custom_call.1} parent=5 // pred_check_branch
        %166 = sbr.rel (%p163) target = $region12
      $region11: #{tpu_custom_call.1} parent=5 // pred_region
        %s167 = ssub.s32 %s17, 1
        // Predicated region
        $region13: #{tpu_custom_call.1} parent=11 // pred_check
          %p168 = pneg %p64
        $region14: #{tpu_custom_call.1} parent=11 // pred_check_branch
          %170 = sbr.rel (%p168) target = $region16
        $region15: #{tpu_custom_call.1} parent=11 // pred_region
          _
        $region16: #{tpu_custom_call.1} parent=11 // pred_fallthru
          _
        // Predicated region
        $region17: #{tpu_custom_call.1} parent=11 // pred_check
          %p171 = pneg %p85
        $region18: #{tpu_custom_call.1} parent=11 // pred_check_branch
          %173 = sbr.rel (%p171) target = $region20
        $region19: #{tpu_custom_call.1} parent=11 // pred_region
          _
        $region20: #{tpu_custom_call.1} parent=11 // pred_fallthru
          _
        // Predicated region
        $region21: #{tpu_custom_call.1} parent=11 // pred_check
          %p174 = pneg %p106
        $region22: #{tpu_custom_call.1} parent=11 // pred_check_branch
          %176 = sbr.rel (%p174) target = $region24
        $region23: #{tpu_custom_call.1} parent=11 // pred_region
          _
        $region24: #{tpu_custom_call.1} parent=11 // pred_fallthru
          _
        // Predicated region
        $region25: #{tpu_custom_call.1} parent=11 // pred_check
          %p177 = pneg %p127
        $region26: #{tpu_custom_call.1} parent=11 // pred_check_branch
          %179 = sbr.rel (%p177) target = $region28
        $region27: #{tpu_custom_call.1} parent=11 // pred_region
          _
        $region28: #{tpu_custom_call.1} parent=11 // pred_fallthru
          _
      $region12: #{tpu_custom_call.1} parent=5 // pred_fallthru
        _
      %p180 = scmp.lt.s32.totalorder %s17, 2
      // Predicated region
      $region29: #{tpu_custom_call.1} parent=5 // pred_check
        %p181 = pneg %p180
      $region30: #{tpu_custom_call.1} parent=5 // pred_check_branch
        %183 = sbr.rel (%p181) target = $region32
      $region31: #{tpu_custom_call.1} parent=5 // pred_region
        // Predicated region
        $region33: #{tpu_custom_call.1} parent=31 // pred_check
          %p184 = pneg %p37
        $region34: #{tpu_custom_call.1} parent=31 // pred_check_branch
          %186 = sbr.rel (%p184) target = $region36
        $region35: #{tpu_custom_call.1} parent=31 // pred_region
          %s187 = sand.u32 %s27, 1
          %s188 = scalar_lea.sflag [#allocation3], %s187
          %s189 = sand.u32 %s27, 1
          %s190 = smul.addr %s189, 8
          %s191 = scalar_lea.vmem [#allocation2], %s190
          %s193 = ssub.s32 128, 128
          %194 = vsyncadd %s188, %s193
          %s195 = smul.addr %s17, 2
          %s196 = smul.addr %s195, 64
          %s197 = scalar_lea.hbm %s0, %s196
          %s199 = sshll.u32 %s191, 4
          %s200 = int_to_ptr.vmem [resolvable:$true] %s199
          %202 = dma.hbm_to_vmem [thread:$0]  %s197, 128, %s200, %s188
        $region36: #{tpu_custom_call.1} parent=31 // pred_fallthru
          _
      $region32: #{tpu_custom_call.1} parent=5 // pred_fallthru
        _
      %p203 = scmp.le.s32.totalorder 1, %s17
      %p204 = scmp.lt.s32.totalorder %s17, 3
      %p205 = pnand %p203, %p204
      %p206 = pneg %p205
      // Predicated region
      $region37: #{tpu_custom_call.1} parent=5 // pred_check
        _
      $region38: #{tpu_custom_call.1} parent=5 // pred_check_branch
        %208 = sbr.rel (%p205) target = $region40
      $region39: #{tpu_custom_call.1} parent=5 // pred_region
        %s209 = ssub.s32 %s17, 1
        %s210 = sand.u32 %s30, 1
        %s211 = scalar_lea.sflag [#allocation3], %s210
        %s212 = sand.u32 %s30, 1
        %s213 = smul.addr %s212, 8
        %s214 = scalar_lea.vmem [#allocation2], %s213
        // Predicated region
        $region41: #{tpu_custom_call.1} parent=39 // pred_check
          %p215 = pneg %p43
        $region42: #{tpu_custom_call.1} parent=39 // pred_check_branch
          %217 = sbr.rel (%p215) target = $region44
        $region43: #{tpu_custom_call.1} parent=39 // pred_region
          %218 = dma.done %s211, 128
        $region44: #{tpu_custom_call.1} parent=39 // pred_fallthru
          _
        %s219 = sand.u32 %s30, 1
        %s220 = scalar_lea.sflag [#allocation3], %s219
        %s221 = sand.u32 %s30, 1
        %s222 = smul.addr %s221, 8
        %s223 = scalar_lea.vmem [#allocation2], %s222
        %p224 = pneg %p43
        %p225 = pneg %p40
        %p226 = pneg %p64
        %p227 = pneg %p61
        %p228 = pneg %p85
        %p229 = pneg %p82
        %p230 = pneg %p106
        %p231 = pneg %p103
        %p232 = pneg %p127
        %p233 = pneg %p124
        %p234 = pneg %p153
        %p235 = pneg %p150
        %s236 = sand.u32 %s140, 1
        %s237 = scalar_lea.sflag [#allocation4], %s236
        %s238 = sand.u32 %s140, 1
        %s239 = smul.addr %s238, 8
        %s240 = scalar_lea.vmem [#allocation5], %s239
        %v241 = vld [vmem:[%s214] sm:$0xff]
        %v243 = vcombine.high %v241, %v241
        %vm245 = vcmask 1043456
        %v246 = vsel %vm245, %v241, 0.0
        %v247 = vsel %vm245, %v243, 0.0
        %v248 = vadd.f32 %v246, %v247
        %249 = vadd.xlane.f32.xlu0 %v248
        %v250 = vpop.xlane.xlu0 %249
        %v251 = vmul.f32 %v250, 0.00390625
        %v252 = vld [vmem:[%s1] sm:$0xf]
        %v253 = vld [vmem:[%s2] sm:$0x1]
        %v255 = vlaneseq
        %v256 = vand.u32 %v255, 127
        %v257 = vlaneseq
        %v258 = vshrl.u32 %v257, 7
        %v259 = vsub.s32 %v256, %v258
        %v260 = vrot.slane %v251, %v259
        %vm261 = vcmask 31744
        %v262 = vsel %vm261, %v260, 0
        %v265 = vsel %vm245, %v252, 0
        %267 = vmatprep.subr.mxu0 0.0
        %268 = vmatpush1.msra.mxu0 %v265
        %269 = vmatprep.subr.mxu0 0.0
        %270 = vmatpush1.msra.mxu0 0.0
        %271 = vmatprep.subr.mxu0 0.0
        %272 = vmatpush1.msra.mxu0 0.0
        %273 = vmatprep.subr.mxu0 0.0
        %274 = vmatpush1.msra.mxu0 0.0
        %275 = vmatprep.subr.mxu0 0.0
        %276 = vmatpush1.msra.mxu0 0.0
        %277 = vmatprep.subr.mxu0 0.0
        %278 = vmatpush1.msra.mxu0 0.0
        %279 = vmatprep.subr.mxu0 0.0
        %280 = vmatpush1.msra.mxu0 0.0
        %281 = vmatprep.subr.mxu0 0.0
        %282 = vmatpush1.msra.mxu0 0.0
        %283 = vmatprep.subr.mxu0 0.0
        %284 = vmatpush1.msra.mxu0 0.0
        %285 = vmatprep.subr.mxu0 0.0
        %286 = vmatpush1.msra.mxu0 0.0
        %287 = vmatprep.subr.mxu0 0.0
        %288 = vmatpush1.msra.mxu0 0.0
        %289 = vmatprep.subr.mxu0 0.0
        %290 = vmatpush1.msra.mxu0 0.0
        %291 = vmatprep.subr.mxu0 0.0
        %292 = vmatpush1.msra.mxu0 0.0
        %293 = vmatprep.subr.mxu0 0.0
        %294 = vmatpush1.msra.mxu0 0.0
        %295 = vmatprep.subr.mxu0 0.0
        %296 = vmatpush1.msra.mxu0 0.0
        %297 = vmatprep.subr.mxu0 0.0
        %298 = vmatpush1.msra.mxu0 0.0
        %299 = vmatprep.subr.mxu0 0.0
        %300 = vmatpush1.msra.mxu0 0.0
        %301 = vmatprep.subr.mxu0 0.0
        %302 = vmatpush1.msra.mxu0 0.0
        %303 = vmatprep.subr.mxu0 0.0
        %304 = vmatpush1.msra.mxu0 0.0
        %305 = vmatprep.subr.mxu0 0.0
        %306 = vmatpush1.msra.mxu0 0.0
        %307 = vmatprep.subr.mxu0 0.0
        %308 = vmatpush1.msra.mxu0 0.0
        %309 = vmatprep.subr.mxu0 0.0
        %310 = vmatpush1.msra.mxu0 0.0
        %311 = vmatprep.subr.mxu0 0.0
        %312 = vmatpush1.msra.mxu0 0.0
        %313 = vmatprep.subr.mxu0 0.0
        %314 = vmatpush1.msra.mxu0 0.0
        %315 = vmatprep.subr.mxu0 0.0
        %316 = vmatpush1.msra.mxu0 0.0
        %317 = vmatprep.subr.mxu0 0.0
        %318 = vmatpush1.msra.mxu0 0.0
        %319 = vmatprep.subr.mxu0 0.0
        %320 = vmatpush1.msra.mxu0 0.0
        %321 = vmatprep.subr.mxu0 0.0
        %322 = vmatpush1.msra.mxu0 0.0
        %323 = vmatprep.subr.mxu0 0.0
        %324 = vmatpush1.msra.mxu0 0.0
        %325 = vmatprep.subr.mxu0 0.0
        %326 = vmatpush1.msra.mxu0 0.0
        %327 = vmatprep.subr.mxu0 0.0
        %328 = vmatpush1.msra.mxu0 0.0
        %329 = vmatprep.subr.mxu0 0.0
        %330 = vmatpush1.msra.mxu0 0.0
        %331 = vmatprep.mubr.f32.mxu0 0.0
        %332 = vmatmul.mubr.f32.gmra.mrb[0].mxu0 %v262
        %v333 = vpop.f32.mrb[0].mxu0
        %v334 = vadd.f32 %v253, %v333
        %v335 = vpop.f32.mrb[0].mxu0
        %336 = vdwg.mxu0
        %v337 = vmax.f32 %v334, 0.0
        %v338 = vld [vmem:[%s3] sm:$0xff]
        %v339 = vld [vmem:[%s4] sm:$0x1]
        %vm340 = vcmask 64512
        %v342 = vsel %vm340, %v337, 0
        %344 = vmatprep.subr.mxu0 0.0
        %345 = vmatpush1.msra.mxu0 %v338
        %346 = vmatprep.subr.mxu0 0.0
        %347 = vmatpush1.msra.mxu0 0.0
        %348 = vmatprep.subr.mxu0 0.0
        %349 = vmatpush1.msra.mxu0 0.0
        %350 = vmatprep.subr.mxu0 0.0
        %351 = vmatpush1.msra.mxu0 0.0
        %352 = vmatprep.subr.mxu0 0.0
        %353 = vmatpush1.msra.mxu0 0.0
        %354 = vmatprep.subr.mxu0 0.0
        %355 = vmatpush1.msra.mxu0 0.0
        %356 = vmatprep.subr.mxu0 0.0
        %357 = vmatpush1.msra.mxu0 0.0
        %358 = vmatprep.subr.mxu0 0.0
        %359 = vmatpush1.msra.mxu0 0.0
        %360 = vmatprep.subr.mxu0 0.0
        %361 = vmatpush1.msra.mxu0 0.0
        %362 = vmatprep.subr.mxu0 0.0
        %363 = vmatpush1.msra.mxu0 0.0
        %364 = vmatprep.subr.mxu0 0.0
        %365 = vmatpush1.msra.mxu0 0.0
        %366 = vmatprep.subr.mxu0 0.0
        %367 = vmatpush1.msra.mxu0 0.0
        %368 = vmatprep.subr.mxu0 0.0
        %369 = vmatpush1.msra.mxu0 0.0
        %370 = vmatprep.subr.mxu0 0.0
        %371 = vmatpush1.msra.mxu0 0.0
        %372 = vmatprep.subr.mxu0 0.0
        %373 = vmatpush1.msra.mxu0 0.0
        %374 = vmatprep.subr.mxu0 0.0
        %375 = vmatpush1.msra.mxu0 0.0
        %376 = vmatprep.subr.mxu0 0.0
        %377 = vmatpush1.msra.mxu0 0.0
        %378 = vmatprep.subr.mxu0 0.0
        %379 = vmatpush1.msra.mxu0 0.0
        %380 = vmatprep.subr.mxu0 0.0
        %381 = vmatpush1.msra.mxu0 0.0
        %382 = vmatprep.subr.mxu0 0.0
        %383 = vmatpush1.msra.mxu0 0.0
        %384 = vmatprep.subr.mxu0 0.0
        %385 = vmatpush1.msra.mxu0 0.0
        %386 = vmatprep.subr.mxu0 0.0
        %387 = vmatpush1.msra.mxu0 0.0
        %388 = vmatprep.subr.mxu0 0.0
        %389 = vmatpush1.msra.mxu0 0.0
        %390 = vmatprep.subr.mxu0 0.0
        %391 = vmatpush1.msra.mxu0 0.0
        %392 = vmatprep.subr.mxu0 0.0
        %393 = vmatpush1.msra.mxu0 0.0
        %394 = vmatprep.subr.mxu0 0.0
        %395 = vmatpush1.msra.mxu0 0.0
        %396 = vmatprep.subr.mxu0 0.0
        %397 = vmatpush1.msra.mxu0 0.0
        %398 = vmatprep.subr.mxu0 0.0
        %399 = vmatpush1.msra.mxu0 0.0
        %400 = vmatprep.subr.mxu0 0.0
        %401 = vmatpush1.msra.mxu0 0.0
        %402 = vmatprep.subr.mxu0 0.0
        %403 = vmatpush1.msra.mxu0 0.0
        %404 = vmatprep.subr.mxu0 0.0
        %405 = vmatpush1.msra.mxu0 0.0
        %406 = vmatprep.subr.mxu0 0.0
        %407 = vmatpush1.msra.mxu0 0.0
        %408 = vmatprep.mubr.f32.mxu0 0.0
        %409 = vmatmul.mubr.f32.gmra.mrb[0].mxu0 %v342
        %v410 = vpop.f32.mrb[0].mxu0
        %v411 = vadd.f32 %v339, %v410
        %v412 = vpop.f32.mrb[0].mxu0
        %413 = vdwg.mxu0
        %v414 = vmul.f32 %v411, 0.16666667
        %v415 = vadd.f32 %v414, 0.5
        %v416 = vmax.f32 %v415, 0.0
        %v417 = vmin.f32 %v416, 1.0
        %v418 = vlaneseq
        %v419 = vshrl.u32 %v418, 7
        %v420 = vsub.s32 0, %v419
        %v421 = vrot.slane %v417, %v420
        %423 = vbcast.lane.b32.xlu0 %v421, 256
        %v424 = vpop.permute.xlu0 %423
        %v427 = vunpack.c.l.s4 839922192
        %v428 = vunpack.c.0.s8 %v427
        %v429 = vlaneseq
        %v430 = vshrl.u32 %v429, 7
        %v431 = vsub.s32 %v428, %v430
        %v432 = vrot.slane %v424, %v431
        %v434 = vmul.f32 %v241, %v432
        %435 = vst [vmem:[%s240] sm:$0xff] %v434
        %s436 = sand.u32 %s140, 1
        %s437 = scalar_lea.sflag [#allocation4], %s436
        %s438 = sand.u32 %s140, 1
        %s439 = smul.addr %s438, 8
        %s440 = scalar_lea.vmem [#allocation5], %s439
        // Predicated region
        $region45: #{tpu_custom_call.1} parent=39 // pred_check
          %p441 = pneg %p150
        $region46: #{tpu_custom_call.1} parent=39 // pred_check_branch
          %443 = sbr.rel (%p441) target = $region48
        $region47: #{tpu_custom_call.1} parent=39 // pred_region
          %s445 = ssub.s32 128, 128
          %446 = vsyncadd %s437, %s445
          %s447 = smul.addr %s22, 2
          %s448 = smul.addr %s447, 64
          %s449 = scalar_lea.hbm %s5, %s448
          %s451 = sshll.u32 %s440, 4
          %s452 = int_to_ptr.vmem [resolvable:$true] %s451
          %454 = dma.vmem_to_hbm [thread:$0]  %s452, 128, %s449, %s437
        $region48: #{tpu_custom_call.1} parent=39 // pred_fallthru
          _
      $region40: #{tpu_custom_call.1} parent=5 // pred_fallthru
        _
      %p455 = scmp.le.s32.totalorder 2, %s17
      // Predicated region
      $region49: #{tpu_custom_call.1} parent=5 // pred_check
        %p456 = pneg %p455
      $region50: #{tpu_custom_call.1} parent=5 // pred_check_branch
        %458 = sbr.rel (%p456) target = $region52
      $region51: #{tpu_custom_call.1} parent=5 // pred_region
        %s459 = ssub.s32 %s17, 2
        // Predicated region
        $region53: #{tpu_custom_call.1} parent=51 // pred_check
          %p460 = pneg %p156
        $region54: #{tpu_custom_call.1} parent=51 // pred_check_branch
          %462 = sbr.rel (%p460) target = $region56
        $region55: #{tpu_custom_call.1} parent=51 // pred_region
          %s463 = sand.u32 %s141, 1
          %s464 = scalar_lea.sflag [#allocation4], %s463
          %s465 = sand.u32 %s141, 1
          %s466 = smul.addr %s465, 8
          %s467 = scalar_lea.vmem [#allocation5], %s466
          %468 = dma.done %s464, 128
        $region56: #{tpu_custom_call.1} parent=51 // pred_fallthru
          _
      $region52: #{tpu_custom_call.1} parent=5 // pred_fallthru
        _
    $region6: #{tpu_custom_call.1} parent=1 // loop_footer
      %s21 = sadd.s32 1, %s17
    $region7: #{tpu_custom_call.1} parent=1 // loop_footer_branch
      %16 = sbr.rel target = $region3
    $region8: #{tpu_custom_call.1} parent=1 // loop_exit
      _
    %469 = vsyncpa [#allocation3], 1
    %s470 = scalar_lea.sflag [#allocation3], 1
    %471 = vsyncpa %s470, 1
    %472 = vsyncpa [#allocation4], 1
    %s473 = scalar_lea.sflag [#allocation4], 1
    %474 = vsyncpa %s473, 1

</llo_original>
